<compile_context>
chip_gen: v5e
topology: v5e:2x2
jax: 0.10.0
libtpu: 0.0.40
codegen_flags: <defaults>
</compile_context>

<pallas_src>
import jax
import jax.numpy as jnp
from jax.experimental import pallas as pl
from jax.experimental.pallas import tpu as pltpu

LANE = 128


def _round_up(n, m):
    return ((n + m - 1) // m) * m


def _cdiv(a, b):
    return -(-a // b)


def _pad2(a, rows, cols, dtype):
    """Zero-pad a 2-D array to (rows, cols) and cast (no-op if already there)."""
    a = a.astype(dtype)
    if a.shape == (rows, cols):
        return a
    out = jnp.zeros((rows, cols), dtype)
    return out.at[: a.shape[0], : a.shape[1]].set(a)


def _mlp_kernel(x_ref, w1_ref, b1_ref, w2_ref, b2_ref, w3_ref, b3_ref, o_ref):
    # Operand cast (if any) happens here on the VPU — DMAing f32 x and casting
    # in-register costs 4 B/elem of HBM traffic vs 8 B/elem for a wrapper cast.
    x = x_ref[...].astype(w1_ref.dtype)
    # fc1 + ReLU  (MXU matmul, f32 accumulation; bias/ReLU on the VPU in f32)
    h1 = jnp.dot(x, w1_ref[...], preferred_element_type=jnp.float32)
    h1 = jnp.maximum(h1 + b1_ref[...], 0.0)
    # fc2 + ReLU
    h2 = jnp.dot(h1.astype(w2_ref.dtype), w2_ref[...],
                 preferred_element_type=jnp.float32)
    h2 = jnp.maximum(h2 + b2_ref[...], 0.0)
    # fc3 (no activation)
    h3 = jnp.dot(h2.astype(w3_ref.dtype), w3_ref[...],
                 preferred_element_type=jnp.float32)
    o_ref[...] = (h3 + b3_ref[...]).astype(o_ref.dtype)


def reaction_predictor_forward(x, params, *, batch_tile=2048,
                               operand_dtype=jnp.bfloat16,
                               pad_output_lanes=False,
                               hidden_lane_multiple=LANE):
    """Fused forward pass of ReactionPredictor.

    x:      (batch, input_size) float32 — passed to the kernel as-is.
    params: dict with w1 (in,hid), b1 (1,hid), w2 (hid,hid), b2 (1,hid),
            w3 (hid,out), b3 (1,out)  (weights stored (in, out), i.e. already
            transposed relative to torch's nn.Linear weight).
    operand_dtype: dtype of the MXU operands (default bf16 — recommended on
            v6e/v7x and fine on v5e). x is cast inside the kernel; biases and
            accumulation always stay float32.
    pad_output_lanes: if True, store a lane-dense (batch, 128k) output and
            slice in the wrapper (prefer on v5e for output-heavy shapes).
    hidden_lane_multiple: pad the hidden dim to this multiple (use 256 on
            v6e/v7x when hidden_size >= 256 and the kernel is MXU-bound).
    returns (batch, output_size) float32.
    """
    w1, b1 = params["w1"], params["b1"].reshape(1, -1)
    w2, b2 = params["w2"], params["b2"].reshape(1, -1)
    w3, b3 = params["w3"], params["b3"].reshape(1, -1)

    batch, in_size = x.shape
    hid_size = w1.shape[1]
    out_size = w3.shape[1]

    op_dtype = jnp.dtype(operand_dtype) if operand_dtype is not None else x.dtype
    itemsz = op_dtype.itemsize

    # Lane padding only for the N dims (hid, and optionally out). Padding is
    # exact: padded weight rows/cols and bias entries are zero, ReLU(0) = 0.
    hid_p = _round_up(hid_size, hidden_lane_multiple)
    out_w = _round_up(out_size, LANE) if pad_output_lanes else out_size

    # One-time weight/bias prep (weights small; done once per call here, once
    # ever in a real deployment).
    w1_p = _pad2(w1, in_size, hid_p, op_dtype)   # K dim stays the true in_size
    w2_p = _pad2(w2, hid_p, hid_p, op_dtype)
    w3_p = _pad2(w3, hid_p, out_w, op_dtype)
    b1_p = _pad2(b1, 1, hid_p, jnp.float32)
    b2_p = _pad2(b2, 1, hid_p, jnp.float32)
    b3_p = _pad2(b3, 1, out_w, jnp.float32)

    # --- batch tiling: weights resident, activations streamed per tile.
    # x stays f32 in HBM, so 8-row alignment suffices; use 16 when bf16
    # operands are in play to keep packed-row layouts trivial.
    row_align = 8 if itemsz >= 4 else 16
    tb = min(batch_tile, max(_cdiv(batch, 4), row_align))  # >=4 steps (v7x)
    tb = _round_up(tb, row_align)
    tb = min(tb, _round_up(batch, row_align))
    num_tiles = _cdiv(batch, tb)   # last tile may be partial (masked store)

    w_elems = w1_p.size + w2_p.size + w3_p.size
    b_elems = b1_p.size + b2_p.size + b3_p.size

    # True (unpadded) flop count and real HBM bytes for the scheduler hint.
    flops = 2 * batch * (in_size * hid_size
                         + hid_size * hid_size
                         + hid_size * out_size)
    bytes_accessed = (batch * in_size * 4           # x read (f32)
                      + w_elems * itemsz + b_elems * 4
                      + batch * out_w * 4)          # output write

    def _call(weight_mode):
        def const_spec(shape):
            # Same block every grid step -> loaded once, VMEM-resident.
            if weight_mode is None:
                return pl.BlockSpec(shape, lambda i: (0, 0))
            return pl.BlockSpec(shape, lambda i: (0, 0),
                                pipeline_mode=weight_mode)

        wbuf = 1 if weight_mode is not None else 2
        in_l = _round_up(in_size, LANE)     # VMEM lane padding of the buffers
        out_l = _round_up(out_w, LANE)
        vmem_est = (2 * tb * in_l * 4                      # x double-buffer
                    + 2 * tb * out_l * 4                   # out double-buffer
                    + wbuf * (w_elems * itemsz + b_elems * 4)
                    + 4 * tb * hid_p * 4)                  # h1/h2 + cast temps
        vmem_limit = min(max(int(vmem_est * 1.5) + (2 << 20), 32 << 20),
                         120 << 20)

        return pl.pallas_call(
            _mlp_kernel,
            out_shape=jax.ShapeDtypeStruct((batch, out_w), jnp.float32),
            grid=(num_tiles,),
            in_specs=[
                pl.BlockSpec((tb, in_size), lambda i: (i, 0)),  # x: streamed
                const_spec((in_size, hid_p)),                   # w1
                const_spec((1, hid_p)),                         # b1
                const_spec((hid_p, hid_p)),                     # w2
                const_spec((1, hid_p)),                         # b2
                const_spec((hid_p, out_w)),                     # w3
                const_spec((1, out_w)),                         # b3
            ],
            out_specs=pl.BlockSpec((tb, out_w), lambda i: (i, 0)),
            compiler_params=pltpu.CompilerParams(
                dimension_semantics=("parallel",),
                vmem_limit_bytes=vmem_limit),
            cost_estimate=pl.CostEstimate(
                flops=flops, transcendentals=0, bytes_accessed=bytes_accessed),
        )(x, w1_p, b1_p, w2_p, b2_p, w3_p, b3_p)

    # Single-buffer the constant (weight/bias) blocks; fall back to default
    # double-buffering if this Pallas build rejects Buffered(1).
    weight_mode = pl.Buffered(1) if hasattr(pl, "Buffered") else None
    try:
        out = _call(weight_mode)
    except Exception:
        if weight_mode is None:
            raise
        out = _call(None)

    if pad_output_lanes:
        return out[:, :out_size]
    return out


def init_params(key, input_size, hidden_size, output_size):
    """Deterministic synthetic parameters (PyTorch nn.Linear-like init)."""
    ks = jax.random.split(key, 6)

    def lin(kw, kb, fan_in, fan_out):
        bound = 1.0 / jnp.sqrt(fan_in)
        w = jax.random.uniform(kw, (fan_in, fan_out), jnp.float32, -bound, bound)
        b = jax.random.uniform(kb, (1, fan_out), jnp.float32, -bound, bound)
        return w, b

    w1, b1 = lin(ks[0], ks[1], input_size, hidden_size)
    w2, b2 = lin(ks[2], ks[3], hidden_size, hidden_size)
    w3, b3 = lin(ks[4], ks[5], hidden_size, output_size)
    return {"w1": w1, "b1": b1, "w2": w2, "b2": b2, "w3": w3, "b3": b3}


def _reference(x, params):
    h = jnp.maximum(x @ params["w1"] + params["b1"], 0.0)
    h = jnp.maximum(h @ params["w2"] + params["b2"], 0.0)
    return h @ params["w3"] + params["b3"]


if __name__ == "__main__":
    key = jax.random.PRNGKey(0)
    kx, kp = jax.random.split(key)

    batch, input_size, hidden_size, output_size = 8, 16, 32, 8
    x = jax.random.normal(kx, (batch, input_size), jnp.float32)
    params = init_params(kp, input_size, hidden_size, output_size)
    ref = _reference(x, params)

    # Exact f32 operand path.
    out_f32 = jax.block_until_ready(
        reaction_predictor_forward(x, params, operand_dtype=jnp.float32))
    assert out_f32.shape == (batch, output_size)
    assert jnp.allclose(out_f32, ref, atol=1e-5, rtol=1e-5)

    # Default path: bf16 MXU operands, f32 accumulation/bias (v6e/v7x default).
    out_bf16 = jax.block_until_ready(reaction_predictor_forward(x, params))
    assert out_bf16.shape == (batch, output_size)
    assert jnp.allclose(out_bf16, ref, atol=5e-2, rtol=5e-2)

    # Lane-dense output variant (wrapper slice path, for v5e-style stores).
    out_dense = jax.block_until_ready(
        reaction_predictor_forward(x, params, operand_dtype=jnp.float32,
                                   pad_output_lanes=True))
    assert jnp.allclose(out_dense, ref, atol=1e-5, rtol=1e-5)

    # Ragged batch (partial last tile, masked store), multi-step grid.
    xb = jax.random.normal(kx, (20, input_size), jnp.float32)
    refb = _reference(xb, params)
    outb = jax.block_until_ready(
        reaction_predictor_forward(xb, params, operand_dtype=jnp.float32,
                                   batch_tile=8))
    assert outb.shape == (20, output_size)
    assert jnp.allclose(outb, refb, atol=1e-5, rtol=1e-5)

    print("KERNEL_OK")
</pallas_src>

<mosaic_0001>
module attributes {stable_mosaic.version = 11 : i64} {
  func.func @_mlp_kernel(%arg0: i32, %arg1: memref<8x16xf32, #tpu.memory_space<vmem>>, %arg2: memref<16x128xf32, #tpu.memory_space<vmem>>, %arg3: memref<1x128xf32, #tpu.memory_space<vmem>>, %arg4: memref<128x128xf32, #tpu.memory_space<vmem>>, %arg5: memref<1x128xf32, #tpu.memory_space<vmem>>, %arg6: memref<128x8xf32, #tpu.memory_space<vmem>>, %arg7: memref<1x8xf32, #tpu.memory_space<vmem>>, %arg8: memref<8x8xf32, #tpu.memory_space<vmem>>) attributes {dimension_semantics = [#tpu.dimension_semantics<parallel>], iteration_bounds = array<i64: 1>, scalar_prefetch = 0 : i64, scratch_operands = 0 : i64, tpu.core_type = #tpu.core_type<tc>, window_params = [{transform_indices = @transform_0, window_bounds = array<i64: 8, 16>}, {pipeline_mode = #tpu.pipeline_mode<synchronous>, transform_indices = @transform_1, window_bounds = array<i64: 16, 128>}, {pipeline_mode = #tpu.pipeline_mode<synchronous>, transform_indices = @transform_2, window_bounds = array<i64: 1, 128>}, {pipeline_mode = #tpu.pipeline_mode<synchronous>, transform_indices = @transform_3, window_bounds = array<i64: 128, 128>}, {pipeline_mode = #tpu.pipeline_mode<synchronous>, transform_indices = @transform_4, window_bounds = array<i64: 1, 128>}, {pipeline_mode = #tpu.pipeline_mode<synchronous>, transform_indices = @transform_5, window_bounds = array<i64: 128, 8>}, {pipeline_mode = #tpu.pipeline_mode<synchronous>, transform_indices = @transform_6, window_bounds = array<i64: 1, 8>}, {transform_indices = @transform_7, window_bounds = array<i64: 8, 8>}]} {
    %c0 = arith.constant 0 : index
    %c0_0 = arith.constant 0 : index
    %0 = vector.load %arg1[%c0, %c0_0] : memref<8x16xf32, #tpu.memory_space<vmem>>, vector<8x16xf32>
    %c0_1 = arith.constant 0 : index
    %c0_2 = arith.constant 0 : index
    %1 = vector.load %arg2[%c0_1, %c0_2] : memref<16x128xf32, #tpu.memory_space<vmem>>, vector<16x128xf32>
    %cst = arith.constant dense<0.000000e+00> : vector<8x128xf32>
    %2 = tpu.matmul %0, %1, %cst {dimension_numbers = #tpu.dot_dimension_numbers<[1], [0], [0], [1], [0, 0, 1, 1], [], []>} : vector<8x16xf32>, vector<16x128xf32>, vector<8x128xf32> -> vector<8x128xf32>
    %c0_3 = arith.constant 0 : index
    %c0_4 = arith.constant 0 : index
    %3 = vector.load %arg3[%c0_3, %c0_4] : memref<1x128xf32, #tpu.memory_space<vmem>>, vector<1x128xf32>
    %4 = vector.broadcast %3 : vector<1x128xf32> to vector<8x128xf32>
    %5 = arith.addf %2, %4 : vector<8x128xf32>
    %cst_5 = arith.constant 0.000000e+00 : f32
    %6 = vector.broadcast %cst_5 : f32 to vector<8x128xf32>
    %7 = arith.maximumf %5, %6 : vector<8x128xf32>
    %c0_6 = arith.constant 0 : index
    %c0_7 = arith.constant 0 : index
    %8 = vector.load %arg4[%c0_6, %c0_7] : memref<128x128xf32, #tpu.memory_space<vmem>>, vector<128x128xf32>
    %cst_8 = arith.constant dense<0.000000e+00> : vector<8x128xf32>
    %9 = tpu.matmul %7, %8, %cst_8 {dimension_numbers = #tpu.dot_dimension_numbers<[1], [0], [0], [1], [0, 0, 1, 1], [], []>} : vector<8x128xf32>, vector<128x128xf32>, vector<8x128xf32> -> vector<8x128xf32>
    %c0_9 = arith.constant 0 : index
    %c0_10 = arith.constant 0 : index
    %10 = vector.load %arg5[%c0_9, %c0_10] : memref<1x128xf32, #tpu.memory_space<vmem>>, vector<1x128xf32>
    %11 = vector.broadcast %10 : vector<1x128xf32> to vector<8x128xf32>
    %12 = arith.addf %9, %11 : vector<8x128xf32>
    %cst_11 = arith.constant 0.000000e+00 : f32
    %13 = vector.broadcast %cst_11 : f32 to vector<8x128xf32>
    %14 = arith.maximumf %12, %13 : vector<8x128xf32>
    %c0_12 = arith.constant 0 : index
    %c0_13 = arith.constant 0 : index
    %15 = vector.load %arg6[%c0_12, %c0_13] : memref<128x8xf32, #tpu.memory_space<vmem>>, vector<128x8xf32>
    %cst_14 = arith.constant dense<0.000000e+00> : vector<8x8xf32>
    %16 = tpu.matmul %14, %15, %cst_14 {dimension_numbers = #tpu.dot_dimension_numbers<[1], [0], [0], [1], [0, 0, 1, 1], [], []>} : vector<8x128xf32>, vector<128x8xf32>, vector<8x8xf32> -> vector<8x8xf32>
    %c0_15 = arith.constant 0 : index
    %c0_16 = arith.constant 0 : index
    %17 = vector.load %arg7[%c0_15, %c0_16] : memref<1x8xf32, #tpu.memory_space<vmem>>, vector<1x8xf32>
    %18 = vector.broadcast %17 : vector<1x8xf32> to vector<8x8xf32>
    %19 = arith.addf %16, %18 : vector<8x8xf32>
    %c0_17 = arith.constant 0 : index
    %c0_18 = arith.constant 0 : index
    %20 = vector.load %arg8[%c0_17, %c0_18] : memref<8x8xf32, #tpu.memory_space<vmem>>, vector<8x8xf32>
    tpu.vector_store %arg8[%c0_17, %c0_18], %19 {strides = array<i32>} : memref<8x8xf32, #tpu.memory_space<vmem>>, vector<8x8xf32>,
    return
  }
  func.func @transform_0(%arg0: i32) -> (i32, i32) {
    %c0_i32 = arith.constant 0 : i32
    %c0_i32_0 = arith.constant 0 : i32
    return %arg0, %c0_i32 : i32, i32
  }
  func.func @transform_1(%arg0: i32) -> (i32, i32) {
    %c0_i32 = arith.constant 0 : i32
    %c0_i32_0 = arith.constant 0 : i32
    %c0_i32_1 = arith.constant 0 : i32
    return %c0_i32, %c0_i32_0 : i32, i32
  }
  func.func @transform_2(%arg0: i32) -> (i32, i32) {
    %c0_i32 = arith.constant 0 : i32
    %c0_i32_0 = arith.constant 0 : i32
    %c0_i32_1 = arith.constant 0 : i32
    return %c0_i32, %c0_i32_0 : i32, i32
  }
  func.func @transform_3(%arg0: i32) -> (i32, i32) {
    %c0_i32 = arith.constant 0 : i32
    %c0_i32_0 = arith.constant 0 : i32
    %c0_i32_1 = arith.constant 0 : i32
    return %c0_i32, %c0_i32_0 : i32, i32
  }
  func.func @transform_4(%arg0: i32) -> (i32, i32) {
    %c0_i32 = arith.constant 0 : i32
    %c0_i32_0 = arith.constant 0 : i32
    %c0_i32_1 = arith.constant 0 : i32
    return %c0_i32, %c0_i32_0 : i32, i32
  }
  func.func @transform_5(%arg0: i32) -> (i32, i32) {
    %c0_i32 = arith.constant 0 : i32
    %c0_i32_0 = arith.constant 0 : i32
    %c0_i32_1 = arith.constant 0 : i32
    return %c0_i32, %c0_i32_0 : i32, i32
  }
  func.func @transform_6(%arg0: i32) -> (i32, i32) {
    %c0_i32 = arith.constant 0 : i32
    %c0_i32_0 = arith.constant 0 : i32
    %c0_i32_1 = arith.constant 0 : i32
    return %c0_i32, %c0_i32_0 : i32, i32
  }
  func.func @transform_7(%arg0: i32) -> (i32, i32) {
    %c0_i32 = arith.constant 0 : i32
    %c0_i32_0 = arith.constant 0 : i32
    return %arg0, %c0_i32 : i32, i32
  }
}

module attributes {stable_mosaic.version = 11 : i64} {
  func.func @_mlp_kernel(%arg0: i32, %arg1: memref<8x16xf32, #tpu.memory_space<vmem>>, %arg2: memref<16x128xf32, #tpu.memory_space<vmem>>, %arg3: memref<1x128xf32, #tpu.memory_space<vmem>>, %arg4: memref<128x128xf32, #tpu.memory_space<vmem>>, %arg5: memref<1x128xf32, #tpu.memory_space<vmem>>, %arg6: memref<128x8xf32, #tpu.memory_space<vmem>>, %arg7: memref<1x8xf32, #tpu.memory_space<vmem>>, %arg8: memref<8x8xf32, #tpu.memory_space<vmem>>) attributes {dimension_semantics = [#tpu.dimension_semantics<parallel>], iteration_bounds = array<i64: 1>, scalar_prefetch = 0 : i64, scratch_operands = 0 : i64, tpu.core_type = #tpu.core_type<tc>, window_params = [{transform_indices = @transform_0, window_bounds = array<i64: 8, 16>}, {pipeline_mode = #tpu.pipeline_mode<synchronous>, transform_indices = @transform_1, window_bounds = array<i64: 16, 128>}, {pipeline_mode = #tpu.pipeline_mode<synchronous>, transform_indices = @transform_2, window_bounds = array<i64: 1, 128>}, {pipeline_mode = #tpu.pipeline_mode<synchronous>, transform_indices = @transform_3, window_bounds = array<i64: 128, 128>}, {pipeline_mode = #tpu.pipeline_mode<synchronous>, transform_indices = @transform_4, window_bounds = array<i64: 1, 128>}, {pipeline_mode = #tpu.pipeline_mode<synchronous>, transform_indices = @transform_5, window_bounds = array<i64: 128, 8>}, {pipeline_mode = #tpu.pipeline_mode<synchronous>, transform_indices = @transform_6, window_bounds = array<i64: 1, 8>}, {transform_indices = @transform_7, window_bounds = array<i64: 8, 8>}]} {
    %c0 = arith.constant 0 : index
    %c0_0 = arith.constant 0 : index
    %0 = vector.load %arg1[%c0, %c0_0] : memref<8x16xf32, #tpu.memory_space<vmem>>, vector<8x16xf32>
    %c0_1 = arith.constant 0 : index
    %c0_2 = arith.constant 0 : index
    %1 = vector.load %arg2[%c0_1, %c0_2] : memref<16x128xf32, #tpu.memory_space<vmem>>, vector<16x128xf32>
    %cst = arith.constant dense<0.000000e+00> : vector<8x128xf32>
    %2 = tpu.matmul %0, %1, %cst {dimension_numbers = #tpu.dot_dimension_numbers<[1], [0], [0], [1], [0, 0, 1, 1], [], []>} : vector<8x16xf32>, vector<16x128xf32>, vector<8x128xf32> -> vector<8x128xf32>
    %c0_3 = arith.constant 0 : index
    %c0_4 = arith.constant 0 : index
    %3 = vector.load %arg3[%c0_3, %c0_4] : memref<1x128xf32, #tpu.memory_space<vmem>>, vector<1x128xf32>
    %4 = vector.broadcast %3 : vector<1x128xf32> to vector<8x128xf32>
    %5 = arith.addf %2, %4 : vector<8x128xf32>
    %cst_5 = arith.constant 0.000000e+00 : f32
    %6 = vector.broadcast %cst_5 : f32 to vector<8x128xf32>
    %7 = arith.maximumf %5, %6 : vector<8x128xf32>
    %c0_6 = arith.constant 0 : index
    %c0_7 = arith.constant 0 : index
    %8 = vector.load %arg4[%c0_6, %c0_7] : memref<128x128xf32, #tpu.memory_space<vmem>>, vector<128x128xf32>
    %cst_8 = arith.constant dense<0.000000e+00> : vector<8x128xf32>
    %9 = tpu.matmul %7, %8, %cst_8 {dimension_numbers = #tpu.dot_dimension_numbers<[1], [0], [0], [1], [0, 0, 1, 1], [], []>} : vector<8x128xf32>, vector<128x128xf32>, vector<8x128xf32> -> vector<8x128xf32>
    %c0_9 = arith.constant 0 : index
    %c0_10 = arith.constant 0 : index
    %10 = vector.load %arg5[%c0_9, %c0_10] : memref<1x128xf32, #tpu.memory_space<vmem>>, vector<1x128xf32>
    %11 = vector.broadcast %10 : vector<1x128xf32> to vector<8x128xf32>
    %12 = arith.addf %9, %11 : vector<8x128xf32>
    %cst_11 = arith.constant 0.000000e+00 : f32
    %13 = vector.broadcast %cst_11 : f32 to vector<8x128xf32>
    %14 = arith.maximumf %12, %13 : vector<8x128xf32>
    %c0_12 = arith.constant 0 : index
    %c0_13 = arith.constant 0 : index
    %15 = vector.load %arg6[%c0_12, %c0_13] : memref<128x8xf32, #tpu.memory_space<vmem>>, vector<128x8xf32>
    %cst_14 = arith.constant dense<0.000000e+00> : vector<8x8xf32>
    %16 = tpu.matmul %14, %15, %cst_14 {dimension_numbers = #tpu.dot_dimension_numbers<[1], [0], [0], [1], [0, 0, 1, 1], [], []>} : vector<8x128xf32>, vector<128x8xf32>, vector<8x8xf32> -> vector<8x8xf32>
    %c0_15 = arith.constant 0 : index
    %c0_16 = arith.constant 0 : index
    %17 = vector.load %arg7[%c0_15, %c0_16] : memref<1x8xf32, #tpu.memory_space<vmem>>, vector<1x8xf32>
    %18 = vector.broadcast %17 : vector<1x8xf32> to vector<8x8xf32>
    %19 = arith.addf %16, %18 : vector<8x8xf32>
    %c0_17 = arith.constant 0 : index
    %c0_18 = arith.constant 0 : index
    %20 = vector.load %arg8[%c0_17, %c0_18] : memref<8x8xf32, #tpu.memory_space<vmem>>, vector<8x8xf32>
    tpu.vector_store %arg8[%c0_17, %c0_18], %19 {strides = array<i32>} : memref<8x8xf32, #tpu.memory_space<vmem>>, vector<8x8xf32>,
    return
  }
  func.func @transform_0(%arg0: i32) -> (i32, i32) {
    %c0_i32 = arith.constant 0 : i32
    %c0_i32_0 = arith.constant 0 : i32
    return %arg0, %c0_i32 : i32, i32
  }
  func.func @transform_1(%arg0: i32) -> (i32, i32) {
    %c0_i32 = arith.constant 0 : i32
    %c0_i32_0 = arith.constant 0 : i32
    %c0_i32_1 = arith.constant 0 : i32
    return %c0_i32, %c0_i32_0 : i32, i32
  }
  func.func @transform_2(%arg0: i32) -> (i32, i32) {
    %c0_i32 = arith.constant 0 : i32
    %c0_i32_0 = arith.constant 0 : i32
    %c0_i32_1 = arith.constant 0 : i32
    return %c0_i32, %c0_i32_0 : i32, i32
  }
  func.func @transform_3(%arg0: i32) -> (i32, i32) {
    %c0_i32 = arith.constant 0 : i32
    %c0_i32_0 = arith.constant 0 : i32
    %c0_i32_1 = arith.constant 0 : i32
    return %c0_i32, %c0_i32_0 : i32, i32
  }
  func.func @transform_4(%arg0: i32) -> (i32, i32) {
    %c0_i32 = arith.constant 0 : i32
    %c0_i32_0 = arith.constant 0 : i32
    %c0_i32_1 = arith.constant 0 : i32
    return %c0_i32, %c0_i32_0 : i32, i32
  }
  func.func @transform_5(%arg0: i32) -> (i32, i32) {
    %c0_i32 = arith.constant 0 : i32
    %c0_i32_0 = arith.constant 0 : i32
    %c0_i32_1 = arith.constant 0 : i32
    return %c0_i32, %c0_i32_0 : i32, i32
  }
  func.func @transform_6(%arg0: i32) -> (i32, i32) {
    %c0_i32 = arith.constant 0 : i32
    %c0_i32_0 = arith.constant 0 : i32
    %c0_i32_1 = arith.constant 0 : i32
    return %c0_i32, %c0_i32_0 : i32, i32
  }
  func.func @transform_7(%arg0: i32) -> (i32, i32) {
    %c0_i32 = arith.constant 0 : i32
    %c0_i32_0 = arith.constant 0 : i32
    return %arg0, %c0_i32 : i32, i32
  }
}

</mosaic_0001>

<llo_original>
// kernel: tpu_custom_call.1
$region0: #{tpu_custom_call.1}
  #allocation0 [shape = 'u32[]', space=smem, size = 0x4, offset = 0x4, fixed_abs, tag = 'smem constant byte address 0x4 - core index']
  #allocation1 [shape = 'u32[72,128]{1,0:T(1,128)}', space=vmem, size = 0x9000, scoped, tag = 'internal scratch']
  %s0 = inlined_call_operand.vmem [shape: f32[8,16], index: 0, kind: input, shape index: {}]
  %s1 = inlined_call_operand.hbm [shape: f32[16,128], index: 1, kind: input, shape index: {}]
  %s2 = inlined_call_operand.vmem [shape: f32[1,128], index: 2, kind: input, shape index: {}]
  %s3 = inlined_call_operand.vmem [shape: f32[128,128], index: 3, kind: input, shape index: {}]
  %s4 = inlined_call_operand.vmem [shape: f32[1,128], index: 4, kind: input, shape index: {}]
  %s5 = inlined_call_operand.vmem [shape: f32[128,8], index: 5, kind: input, shape index: {}]
  %s6 = inlined_call_operand.vmem [shape: f32[1,8], index: 6, kind: input, shape index: {}]
  %s7 = inlined_call_operand.hbm [shape: f32[8,8], index: 7, kind: output, shape index: {}]
  %s8 = sld [smem:[#allocation0]]
  $region42: #{tpu_custom_call.1} parent=0
    _
  %s10 = ssub.s32 1, %s8
  %s11 = scalar_select 0, %s10, %s8
  $region1: #{tpu_custom_call.1} parent=0
    #allocation2 [shape = 'u8[8192]{0}', space=vmem, size = 0x2000, scoped, tag = 'input window, operand 1, single buffered']
    #allocation3 [shape = 's32[1]{0}', space=sflag, size = 0x4, scoped, tag = 'scoped memory for tpu_custom_call.1']
    #allocation4 [shape = 's32[1]{0}', space=sflag, size = 0x4, scoped, tag = 'scoped memory for tpu_custom_call.1']
    #allocation5 [shape = 'u8[4096]{0}', space=vmem, size = 0x1000, scoped, tag = 'output window, operand 0, single buffered']
    %12 = vsyncpa [#allocation3], 0
    %13 = vsyncpa [#allocation4], 0
    // Predicated region
    $region2: #{tpu_custom_call.1} parent=1 // pred_check
      _
    $region3: #{tpu_custom_call.1} parent=1 // pred_check_branch
      %15 = sbr.rel (0) target = $region5
    $region4: #{tpu_custom_call.1} parent=1 // pred_region
      _
    $region5: #{tpu_custom_call.1} parent=1 // pred_fallthru
      _
    // Predicated region
    $region6: #{tpu_custom_call.1} parent=1 // pred_check
      _
    $region7: #{tpu_custom_call.1} parent=1 // pred_check_branch
      %17 = sbr.rel (0) target = $region9
    $region8: #{tpu_custom_call.1} parent=1 // pred_region
      %19 = vsyncadd [#allocation3], 0
      %s20 = sshll.u32 %s1, 4
      %s21 = int_to_ptr.hbm [resolvable:$true] %s20
      %s22 = sshll.u32 [#allocation2], 4
      %s23 = int_to_ptr.vmem [resolvable:$true] %s22
      %28 = dma.hbm_to_vmem [thread:$0]  %s21, 256, %s23, [#allocation3], 128, 128, 8
    $region9: #{tpu_custom_call.1} parent=1 // pred_fallthru
      _
    // Predicated region
    $region10: #{tpu_custom_call.1} parent=1 // pred_check
      _
    $region11: #{tpu_custom_call.1} parent=1 // pred_check_branch
      %30 = sbr.rel (0) target = $region13
    $region12: #{tpu_custom_call.1} parent=1 // pred_region
      _
    $region13: #{tpu_custom_call.1} parent=1 // pred_fallthru
      _
    // Predicated region
    $region14: #{tpu_custom_call.1} parent=1 // pred_check
      _
    $region15: #{tpu_custom_call.1} parent=1 // pred_check_branch
      %32 = sbr.rel (0) target = $region17
    $region16: #{tpu_custom_call.1} parent=1 // pred_region
      _
    $region17: #{tpu_custom_call.1} parent=1 // pred_fallthru
      _
    // Predicated region
    $region18: #{tpu_custom_call.1} parent=1 // pred_check
      _
    $region19: #{tpu_custom_call.1} parent=1 // pred_check_branch
      %34 = sbr.rel (0) target = $region21
    $region20: #{tpu_custom_call.1} parent=1 // pred_region
      _
    $region21: #{tpu_custom_call.1} parent=1 // pred_fallthru
      _
    // Predicated region
    $region22: #{tpu_custom_call.1} parent=1 // pred_check
      _
    $region23: #{tpu_custom_call.1} parent=1 // pred_check_branch
      %36 = sbr.rel (0) target = $region25
    $region24: #{tpu_custom_call.1} parent=1 // pred_region
      _
    $region25: #{tpu_custom_call.1} parent=1 // pred_fallthru
      _
    // Predicated region
    $region26: #{tpu_custom_call.1} parent=1 // pred_check
      _
    $region27: #{tpu_custom_call.1} parent=1 // pred_check_branch
      %38 = sbr.rel (0) target = $region29
    $region28: #{tpu_custom_call.1} parent=1 // pred_region
      _
    $region29: #{tpu_custom_call.1} parent=1 // pred_fallthru
      _
    // Predicated region
    $region30: #{tpu_custom_call.1} parent=1 // pred_check
      _
    $region31: #{tpu_custom_call.1} parent=1 // pred_check_branch
      %40 = sbr.rel (0) target = $region33
    $region32: #{tpu_custom_call.1} parent=1 // pred_region
      %42 = dma.done [#allocation3], 256
    $region33: #{tpu_custom_call.1} parent=1 // pred_fallthru
      _
    %v43 = vld [vmem:[%s0] sm:$0xff]
    %v44 = vld [vmem:[#allocation2] sm:$0xff]
    %v45 = vld [vmem:[#allocation2 + $0x8] sm:$0xff]
    %v46 = vld [vmem:[%s2] sm:$0x1]
    %v48 = vperm.slane %v46, 0
    %vm50 = vcmask 130048
    %v52 = vsel %vm50, %v43, 0
    %54 = vmatpush.msra.mxu0 0.0
    %55 = vmatpush.msra.mxu0 0.0
    %56 = vmatpush.msra.mxu0 0.0
    %57 = vmatpush.msra.mxu0 0.0
    %58 = vmatpush.msra.mxu0 0.0
    %59 = vmatpush.msra.mxu0 0.0
    %60 = vmatpush.msra.mxu0 0.0
    %61 = vmatpush.msra.mxu0 0.0
    %62 = vmatpush.msra.mxu0 0.0
    %63 = vmatpush.msra.mxu0 0.0
    %64 = vmatpush.msra.mxu0 0.0
    %65 = vmatpush.msra.mxu0 0.0
    %66 = vmatpush.msra.mxu0 0.0
    %67 = vmatpush.msra.mxu0 0.0
    %68 = vmatpush.msra.mxu0 %v45
    %69 = vmatpush.msra.mxu0 %v44
    %70 = vmatmul.f32.gmra.mxu0 %v52
    %v71 = vpop.f32.mrf.mxu0
    %v72 = vadd.f32 %v48, %v71
    %73 = vdwg.mxu0
    %v74 = vmax.f32 %v72, 0.0
    %v75 = vld [vmem:[%s3] sm:$0xff]
    %v76 = vld [vmem:[%s3 + $0x8] sm:$0xff]
    %v77 = vld [vmem:[%s3 + $0x10] sm:$0xff]
    %v78 = vld [vmem:[%s3 + $0x18] sm:$0xff]
    %v79 = vld [vmem:[%s3 + $0x20] sm:$0xff]
    %v80 = vld [vmem:[%s3 + $0x28] sm:$0xff]
    %v81 = vld [vmem:[%s3 + $0x30] sm:$0xff]
    %v82 = vld [vmem:[%s3 + $0x38] sm:$0xff]
    %v83 = vld [vmem:[%s3 + $0x40] sm:$0xff]
    %v84 = vld [vmem:[%s3 + $0x48] sm:$0xff]
    %v85 = vld [vmem:[%s3 + $0x50] sm:$0xff]
    %v86 = vld [vmem:[%s3 + $0x58] sm:$0xff]
    %v87 = vld [vmem:[%s3 + $0x60] sm:$0xff]
    %v88 = vld [vmem:[%s3 + $0x68] sm:$0xff]
    %v89 = vld [vmem:[%s3 + $0x70] sm:$0xff]
    %v90 = vld [vmem:[%s3 + $0x78] sm:$0xff]
    %v91 = vld [vmem:[%s4] sm:$0x1]
    %v93 = vperm.slane %v91, 0
    %95 = vmatpush.msra.mxu0 %v90
    %96 = vmatpush.msra.mxu0 %v89
    %97 = vmatpush.msra.mxu0 %v88
    %98 = vmatpush.msra.mxu0 %v87
    %99 = vmatpush.msra.mxu0 %v86
    %100 = vmatpush.msra.mxu0 %v85
    %101 = vmatpush.msra.mxu0 %v84
    %102 = vmatpush.msra.mxu0 %v83
    %103 = vmatpush.msra.mxu0 %v82
    %104 = vmatpush.msra.mxu0 %v81
    %105 = vmatpush.msra.mxu0 %v80
    %106 = vmatpush.msra.mxu0 %v79
    %107 = vmatpush.msra.mxu0 %v78
    %108 = vmatpush.msra.mxu0 %v77
    %109 = vmatpush.msra.mxu0 %v76
    %110 = vmatpush.msra.mxu0 %v75
    %111 = vmatmul.f32.gmra.mxu0 %v74
    %v112 = vpop.f32.mrf.mxu0
    %v113 = vadd.f32 %v93, %v112
    %114 = vdwg.mxu0
    %v115 = vmax.f32 %v113, 0.0
    %v116 = vld [vmem:[%s5] sm:$0xff]
    %v117 = vld [vmem:[%s5 + $0x8] sm:$0xff]
    %v118 = vld [vmem:[%s5 + $0x10] sm:$0xff]
    %v119 = vld [vmem:[%s5 + $0x18] sm:$0xff]
    %v120 = vld [vmem:[%s5 + $0x20] sm:$0xff]
    %v121 = vld [vmem:[%s5 + $0x28] sm:$0xff]
    %v122 = vld [vmem:[%s5 + $0x30] sm:$0xff]
    %v123 = vld [vmem:[%s5 + $0x38] sm:$0xff]
    %v124 = vld [vmem:[%s5 + $0x40] sm:$0xff]
    %v125 = vld [vmem:[%s5 + $0x48] sm:$0xff]
    %v126 = vld [vmem:[%s5 + $0x50] sm:$0xff]
    %v127 = vld [vmem:[%s5 + $0x58] sm:$0xff]
    %v128 = vld [vmem:[%s5 + $0x60] sm:$0xff]
    %v129 = vld [vmem:[%s5 + $0x68] sm:$0xff]
    %v130 = vld [vmem:[%s5 + $0x70] sm:$0xff]
    %v131 = vld [vmem:[%s5 + $0x78] sm:$0xff]
    %v132 = vld [vmem:[%s6] sm:$0x1]
    %v134 = vperm.slane %v132, 0
    %136 = vmatpush.msra.mxu0 %v131
    %137 = vmatpush.msra.mxu0 %v130
    %138 = vmatpush.msra.mxu0 %v129
    %139 = vmatpush.msra.mxu0 %v128
    %140 = vmatpush.msra.mxu0 %v127
    %141 = vmatpush.msra.mxu0 %v126
    %142 = vmatpush.msra.mxu0 %v125
    %143 = vmatpush.msra.mxu0 %v124
    %144 = vmatpush.msra.mxu0 %v123
    %145 = vmatpush.msra.mxu0 %v122
    %146 = vmatpush.msra.mxu0 %v121
    %147 = vmatpush.msra.mxu0 %v120
    %148 = vmatpush.msra.mxu0 %v119
    %149 = vmatpush.msra.mxu0 %v118
    %150 = vmatpush.msra.mxu0 %v117
    %151 = vmatpush.msra.mxu0 %v116
    %152 = vmatmul.f32.gmra.mxu0 %v115
    %v153 = vpop.f32.mrf.mxu0
    %v154 = vadd.f32 %v134, %v153
    %155 = vdwg.mxu0
    %vm156 = vcmask 64512
    %157 = vst.msk [vmem:[#allocation5] sm:$0xff] %vm156, %v154
    // Predicated region
    $region34: #{tpu_custom_call.1} parent=1 // pred_check
      _
    $region35: #{tpu_custom_call.1} parent=1 // pred_check_branch
      %159 = sbr.rel (0) target = $region37
    $region36: #{tpu_custom_call.1} parent=1 // pred_region
      %161 = vsyncadd [#allocation4], 0
      %s163 = sshll.u32 [#allocation5], 4
      %s164 = int_to_ptr.vmem [resolvable:$true] %s163
      %s165 = sshll.u32 %s7, 4
      %s166 = int_to_ptr.hbm [resolvable:$true] %s165
      %168 = dma.vmem_to_hbm [thread:$0]  %s164, 128, %s166, [#allocation4]
    $region37: #{tpu_custom_call.1} parent=1 // pred_fallthru
      _
    // Predicated region
    $region38: #{tpu_custom_call.1} parent=1 // pred_check
      _
    $region39: #{tpu_custom_call.1} parent=1 // pred_check_branch
      %170 = sbr.rel (0) target = $region41
    $region40: #{tpu_custom_call.1} parent=1 // pred_region
      %172 = dma.done [#allocation4], 128
    $region41: #{tpu_custom_call.1} parent=1 // pred_fallthru
      _
    %173 = vsyncpa [#allocation3], 1
    %174 = vsyncpa [#allocation4], 1

// kernel: tpu_custom_call.1
$region0: #{tpu_custom_call.1}
  #allocation0 [shape = 'u32[]', space=smem, size = 0x4, offset = 0x4, fixed_abs, tag = 'smem constant byte address 0x4 - core index']
  #allocation1 [shape = 'u32[72,128]{1,0:T(1,128)}', space=vmem, size = 0x9000, scoped, tag = 'internal scratch']
  %s0 = inlined_call_operand.vmem [shape: f32[8,16], index: 0, kind: input, shape index: {}]
  %s1 = inlined_call_operand.hbm [shape: f32[16,128], index: 1, kind: input, shape index: {}]
  %s2 = inlined_call_operand.vmem [shape: f32[1,128], index: 2, kind: input, shape index: {}]
  %s3 = inlined_call_operand.vmem [shape: f32[128,128], index: 3, kind: input, shape index: {}]
  %s4 = inlined_call_operand.vmem [shape: f32[1,128], index: 4, kind: input, shape index: {}]
  %s5 = inlined_call_operand.vmem [shape: f32[128,8], index: 5, kind: input, shape index: {}]
  %s6 = inlined_call_operand.vmem [shape: f32[1,8], index: 6, kind: input, shape index: {}]
  %s7 = inlined_call_operand.hbm [shape: f32[8,8], index: 7, kind: output, shape index: {}]
  %s8 = sld [smem:[#allocation0]]
  $region42: #{tpu_custom_call.1} parent=0
    _
  %s10 = ssub.s32 1, %s8
  %s11 = scalar_select 0, %s10, %s8
  $region1: #{tpu_custom_call.1} parent=0
    #allocation2 [shape = 'u8[8192]{0}', space=vmem, size = 0x2000, scoped, tag = 'input window, operand 1, single buffered']
    #allocation3 [shape = 's32[1]{0}', space=sflag, size = 0x4, scoped, tag = 'scoped memory for tpu_custom_call.1']
    #allocation4 [shape = 's32[1]{0}', space=sflag, size = 0x4, scoped, tag = 'scoped memory for tpu_custom_call.1']
    #allocation5 [shape = 'u8[4096]{0}', space=vmem, size = 0x1000, scoped, tag = 'output window, operand 0, single buffered']
    %12 = vsyncpa [#allocation3], 0
    %13 = vsyncpa [#allocation4], 0
    // Predicated region
    $region2: #{tpu_custom_call.1} parent=1 // pred_check
      _
    $region3: #{tpu_custom_call.1} parent=1 // pred_check_branch
      %15 = sbr.rel (0) target = $region5
    $region4: #{tpu_custom_call.1} parent=1 // pred_region
      _
    $region5: #{tpu_custom_call.1} parent=1 // pred_fallthru
      _
    // Predicated region
    $region6: #{tpu_custom_call.1} parent=1 // pred_check
      _
    $region7: #{tpu_custom_call.1} parent=1 // pred_check_branch
      %17 = sbr.rel (0) target = $region9
    $region8: #{tpu_custom_call.1} parent=1 // pred_region
      %19 = vsyncadd [#allocation3], 0
      %s20 = sshll.u32 %s1, 4
      %s21 = int_to_ptr.hbm [resolvable:$true] %s20
      %s22 = sshll.u32 [#allocation2], 4
      %s23 = int_to_ptr.vmem [resolvable:$true] %s22
      %28 = dma.hbm_to_vmem [thread:$0]  %s21, 256, %s23, [#allocation3], 128, 128, 8
    $region9: #{tpu_custom_call.1} parent=1 // pred_fallthru
      _
    // Predicated region
    $region10: #{tpu_custom_call.1} parent=1 // pred_check
      _
    $region11: #{tpu_custom_call.1} parent=1 // pred_check_branch
      %30 = sbr.rel (0) target = $region13
    $region12: #{tpu_custom_call.1} parent=1 // pred_region
      _
    $region13: #{tpu_custom_call.1} parent=1 // pred_fallthru
      _
    // Predicated region
    $region14: #{tpu_custom_call.1} parent=1 // pred_check
      _
    $region15: #{tpu_custom_call.1} parent=1 // pred_check_branch
      %32 = sbr.rel (0) target = $region17
    $region16: #{tpu_custom_call.1} parent=1 // pred_region
      _
    $region17: #{tpu_custom_call.1} parent=1 // pred_fallthru
      _
    // Predicated region
    $region18: #{tpu_custom_call.1} parent=1 // pred_check
      _
    $region19: #{tpu_custom_call.1} parent=1 // pred_check_branch
      %34 = sbr.rel (0) target = $region21
    $region20: #{tpu_custom_call.1} parent=1 // pred_region
      _
    $region21: #{tpu_custom_call.1} parent=1 // pred_fallthru
      _
    // Predicated region
    $region22: #{tpu_custom_call.1} parent=1 // pred_check
      _
    $region23: #{tpu_custom_call.1} parent=1 // pred_check_branch
      %36 = sbr.rel (0) target = $region25
    $region24: #{tpu_custom_call.1} parent=1 // pred_region
      _
    $region25: #{tpu_custom_call.1} parent=1 // pred_fallthru
      _
    // Predicated region
    $region26: #{tpu_custom_call.1} parent=1 // pred_check
      _
    $region27: #{tpu_custom_call.1} parent=1 // pred_check_branch
      %38 = sbr.rel (0) target = $region29
    $region28: #{tpu_custom_call.1} parent=1 // pred_region
      _
    $region29: #{tpu_custom_call.1} parent=1 // pred_fallthru
      _
    // Predicated region
    $region30: #{tpu_custom_call.1} parent=1 // pred_check
      _
    $region31: #{tpu_custom_call.1} parent=1 // pred_check_branch
      %40 = sbr.rel (0) target = $region33
    $region32: #{tpu_custom_call.1} parent=1 // pred_region
      %42 = dma.done [#allocation3], 256
    $region33: #{tpu_custom_call.1} parent=1 // pred_fallthru
      _
    %v43 = vld [vmem:[%s0] sm:$0xff]
    %v44 = vld [vmem:[#allocation2] sm:$0xff]
    %v45 = vld [vmem:[#allocation2 + $0x8] sm:$0xff]
    %v46 = vld [vmem:[%s2] sm:$0x1]
    %v48 = vperm.slane %v46, 0
    %vm50 = vcmask 130048
    %v52 = vsel %vm50, %v43, 0
    %54 = vmatpush.msra.mxu0 0.0
    %55 = vmatpush.msra.mxu0 0.0
    %56 = vmatpush.msra.mxu0 0.0
    %57 = vmatpush.msra.mxu0 0.0
    %58 = vmatpush.msra.mxu0 0.0
    %59 = vmatpush.msra.mxu0 0.0
    %60 = vmatpush.msra.mxu0 0.0
    %61 = vmatpush.msra.mxu0 0.0
    %62 = vmatpush.msra.mxu0 0.0
    %63 = vmatpush.msra.mxu0 0.0
    %64 = vmatpush.msra.mxu0 0.0
    %65 = vmatpush.msra.mxu0 0.0
    %66 = vmatpush.msra.mxu0 0.0
    %67 = vmatpush.msra.mxu0 0.0
    %68 = vmatpush.msra.mxu0 %v45
    %69 = vmatpush.msra.mxu0 %v44
    %70 = vmatmul.f32.gmra.mxu0 %v52
    %v71 = vpop.f32.mrf.mxu0
    %v72 = vadd.f32 %v48, %v71
    %73 = vdwg.mxu0
    %v74 = vmax.f32 %v72, 0.0
    %v75 = vld [vmem:[%s3] sm:$0xff]
    %v76 = vld [vmem:[%s3 + $0x8] sm:$0xff]
    %v77 = vld [vmem:[%s3 + $0x10] sm:$0xff]
    %v78 = vld [vmem:[%s3 + $0x18] sm:$0xff]
    %v79 = vld [vmem:[%s3 + $0x20] sm:$0xff]
    %v80 = vld [vmem:[%s3 + $0x28] sm:$0xff]
    %v81 = vld [vmem:[%s3 + $0x30] sm:$0xff]
    %v82 = vld [vmem:[%s3 + $0x38] sm:$0xff]
    %v83 = vld [vmem:[%s3 + $0x40] sm:$0xff]
    %v84 = vld [vmem:[%s3 + $0x48] sm:$0xff]
    %v85 = vld [vmem:[%s3 + $0x50] sm:$0xff]
    %v86 = vld [vmem:[%s3 + $0x58] sm:$0xff]
    %v87 = vld [vmem:[%s3 + $0x60] sm:$0xff]
    %v88 = vld [vmem:[%s3 + $0x68] sm:$0xff]
    %v89 = vld [vmem:[%s3 + $0x70] sm:$0xff]
    %v90 = vld [vmem:[%s3 + $0x78] sm:$0xff]
    %v91 = vld [vmem:[%s4] sm:$0x1]
    %v93 = vperm.slane %v91, 0
    %95 = vmatpush.msra.mxu0 %v90
    %96 = vmatpush.msra.mxu0 %v89
    %97 = vmatpush.msra.mxu0 %v88
    %98 = vmatpush.msra.mxu0 %v87
    %99 = vmatpush.msra.mxu0 %v86
    %100 = vmatpush.msra.mxu0 %v85
    %101 = vmatpush.msra.mxu0 %v84
    %102 = vmatpush.msra.mxu0 %v83
    %103 = vmatpush.msra.mxu0 %v82
    %104 = vmatpush.msra.mxu0 %v81
    %105 = vmatpush.msra.mxu0 %v80
    %106 = vmatpush.msra.mxu0 %v79
    %107 = vmatpush.msra.mxu0 %v78
    %108 = vmatpush.msra.mxu0 %v77
    %109 = vmatpush.msra.mxu0 %v76
    %110 = vmatpush.msra.mxu0 %v75
    %111 = vmatmul.f32.gmra.mxu0 %v74
    %v112 = vpop.f32.mrf.mxu0
    %v113 = vadd.f32 %v93, %v112
    %114 = vdwg.mxu0
    %v115 = vmax.f32 %v113, 0.0
    %v116 = vld [vmem:[%s5] sm:$0xff]
    %v117 = vld [vmem:[%s5 + $0x8] sm:$0xff]
    %v118 = vld [vmem:[%s5 + $0x10] sm:$0xff]
    %v119 = vld [vmem:[%s5 + $0x18] sm:$0xff]
    %v120 = vld [vmem:[%s5 + $0x20] sm:$0xff]
    %v121 = vld [vmem:[%s5 + $0x28] sm:$0xff]
    %v122 = vld [vmem:[%s5 + $0x30] sm:$0xff]
    %v123 = vld [vmem:[%s5 + $0x38] sm:$0xff]
    %v124 = vld [vmem:[%s5 + $0x40] sm:$0xff]
    %v125 = vld [vmem:[%s5 + $0x48] sm:$0xff]
    %v126 = vld [vmem:[%s5 + $0x50] sm:$0xff]
    %v127 = vld [vmem:[%s5 + $0x58] sm:$0xff]
    %v128 = vld [vmem:[%s5 + $0x60] sm:$0xff]
    %v129 = vld [vmem:[%s5 + $0x68] sm:$0xff]
    %v130 = vld [vmem:[%s5 + $0x70] sm:$0xff]
    %v131 = vld [vmem:[%s5 + $0x78] sm:$0xff]
    %v132 = vld [vmem:[%s6] sm:$0x1]
    %v134 = vperm.slane %v132, 0
    %136 = vmatpush.msra.mxu0 %v131
    %137 = vmatpush.msra.mxu0 %v130
    %138 = vmatpush.msra.mxu0 %v129
    %139 = vmatpush.msra.mxu0 %v128
    %140 = vmatpush.msra.mxu0 %v127
    %141 = vmatpush.msra.mxu0 %v126
    %142 = vmatpush.msra.mxu0 %v125
    %143 = vmatpush.msra.mxu0 %v124
    %144 = vmatpush.msra.mxu0 %v123
    %145 = vmatpush.msra.mxu0 %v122
    %146 = vmatpush.msra.mxu0 %v121
    %147 = vmatpush.msra.mxu0 %v120
    %148 = vmatpush.msra.mxu0 %v119
    %149 = vmatpush.msra.mxu0 %v118
    %150 = vmatpush.msra.mxu0 %v117
    %151 = vmatpush.msra.mxu0 %v116
    %152 = vmatmul.f32.gmra.mxu0 %v115
    %v153 = vpop.f32.mrf.mxu0
    %v154 = vadd.f32 %v134, %v153
    %155 = vdwg.mxu0
    %vm156 = vcmask 64512
    %157 = vst.msk [vmem:[#allocation5] sm:$0xff] %vm156, %v154
    // Predicated region
    $region34: #{tpu_custom_call.1} parent=1 // pred_check
      _
    $region35: #{tpu_custom_call.1} parent=1 // pred_check_branch
      %159 = sbr.rel (0) target = $region37
    $region36: #{tpu_custom_call.1} parent=1 // pred_region
      %161 = vsyncadd [#allocation4], 0
      %s163 = sshll.u32 [#allocation5], 4
      %s164 = int_to_ptr.vmem [resolvable:$true] %s163
      %s165 = sshll.u32 %s7, 4
      %s166 = int_to_ptr.hbm [resolvable:$true] %s165
      %168 = dma.vmem_to_hbm [thread:$0]  %s164, 128, %s166, [#allocation4]
    $region37: #{tpu_custom_call.1} parent=1 // pred_fallthru
      _
    // Predicated region
    $region38: #{tpu_custom_call.1} parent=1 // pred_check
      _
    $region39: #{tpu_custom_call.1} parent=1 // pred_check_branch
      %170 = sbr.rel (0) target = $region41
    $region40: #{tpu_custom_call.1} parent=1 // pred_region
      %172 = dma.done [#allocation4], 128
    $region41: #{tpu_custom_call.1} parent=1 // pred_fallthru
      _
    %173 = vsyncpa [#allocation3], 1
    %174 = vsyncpa [#allocation4], 1

</llo_original>
